<compile_context>
chip_gen: v7x
topology: tpu7x:2x2x1
jax: 0.10.0
libtpu: 0.0.40
codegen_flags: <defaults>
</compile_context>

<pallas_src>
import jax
import jax.numpy as jnp
from jax import lax
from jax.experimental import pallas as pl
from jax.experimental.pallas import tpu as pltpu


def _mlp_kernel(x_ref, w_ref, b_ref, o_ref, acc_ref):
    # x_ref: [tm, tk], w_ref: [tn, tk], b_ref: [1, tn], o_ref: [tm, tn]
    k = pl.program_id(2)

    @pl.when(k == 0)
    def _():
        acc_ref[...] = jnp.zeros_like(acc_ref)

    # Contract over the shared K dim (weight kept in PyTorch [N, K] layout;
    # no materialized transpose needed -- the MXU consumes it directly).
    acc_ref[...] += lax.dot_general(
        x_ref[...], w_ref[...],
        dimension_numbers=(((1,), (1,)), ((), ())),
        preferred_element_type=jnp.float32,
    )

    @pl.when(k == pl.num_programs(2) - 1)
    def _():
        o_ref[...] = (acc_ref[...] + b_ref[...].astype(jnp.float32)).astype(o_ref.dtype)


def _round_up(x, m):
    return ((x + m - 1) // m) * m


def mlp_forward(x, weight, bias, *, tm=256, tn=256, tk=512):
    """x: [B, ...] (e.g. NCHW); weight: [N, K] (PyTorch layout); bias: [N]."""
    B = x.shape[0]
    x_flat = x.reshape(B, -1)               # same as torch .view(B, -1), row-major
    K = x_flat.shape[1]
    N = weight.shape[0]

    # Clamp tiles to the (padded) problem size; keep TPU tiling alignment:
    # M tile multiple of 8 (f32 sublane), N/K tiles multiples of 128 (lane).
    tm = min(tm, _round_up(B, 8))
    tn = min(tn, _round_up(N, 128))
    tk = min(tk, _round_up(K, 128))

    M_pad = _round_up(B, tm)
    N_pad = _round_up(N, tn)
    K_pad = _round_up(K, tk)

    x_p = x_flat
    if (M_pad != B) or (K_pad != K):
        x_p = jnp.pad(x_flat, ((0, M_pad - B), (0, K_pad - K)))
    w_p = weight
    if (N_pad != N) or (K_pad != K):
        w_p = jnp.pad(weight, ((0, N_pad - N), (0, K_pad - K)))
    b_p = bias if N_pad == N else jnp.pad(bias, (0, N_pad - N))
    b2d = b_p.reshape(1, N_pad)

    grid = (M_pad // tm, N_pad // tn, K_pad // tk)

    out_dtype = x.dtype
    cost = pl.CostEstimate(
        flops=2 * M_pad * N_pad * K_pad,
        transcendentals=0,
        bytes_accessed=(x_p.size * x_p.dtype.itemsize
                        + w_p.size * w_p.dtype.itemsize
                        + b2d.size * b2d.dtype.itemsize
                        + M_pad * N_pad * jnp.dtype(out_dtype).itemsize),
    )

    out = pl.pallas_call(
        _mlp_kernel,
        out_shape=jax.ShapeDtypeStruct((M_pad, N_pad), out_dtype),
        grid_spec=pltpu.PrefetchScalarGridSpec(
            num_scalar_prefetch=0,
            grid=grid,
            in_specs=[
                pl.BlockSpec((tm, tk), lambda i, j, k: (i, k)),   # x tile
                pl.BlockSpec((tn, tk), lambda i, j, k: (j, k)),   # weight tile [N,K]
                pl.BlockSpec((1, tn), lambda i, j, k: (0, j)),    # bias tile
            ],
            out_specs=pl.BlockSpec((tm, tn), lambda i, j, k: (i, j)),
            scratch_shapes=[pltpu.VMEM((tm, tn), jnp.float32)],
        ),
        compiler_params=pltpu.CompilerParams(
            dimension_semantics=("parallel", "parallel", "arbitrary"),
            vmem_limit_bytes=48 << 20,
        ),
        cost_estimate=cost,
    )(x_p, w_p, b2d)

    # Slice off the M/N padding before returning.
    return out[:B, :N]


if __name__ == "__main__":
    key = jax.random.PRNGKey(0)
    kx, kw, kb = jax.random.split(key, 3)

    # Small shapes consistent with the module's forward: NCHW input flattened.
    B, C, H, W = 2, 4, 16, 16
    input_size = C * H * W                  # 1024
    output_size = 32

    x = jax.random.normal(kx, (B, C, H, W), dtype=jnp.float32)
    # Deterministic "Linear" params (PyTorch shapes: weight [out, in], bias [out]).
    bound = 1.0 / (input_size ** 0.5)
    weight = jax.random.uniform(kw, (output_size, input_size),
                                minval=-bound, maxval=bound, dtype=jnp.float32)
    bias = jax.random.uniform(kb, (output_size,),
                              minval=-bound, maxval=bound, dtype=jnp.float32)

    out = mlp_forward(x, weight, bias)
    out = jax.block_until_ready(out)

    # Reference check against plain JAX.
    ref = x.reshape(B, -1) @ weight.T + bias
    assert out.shape == (B, output_size)
    assert jnp.allclose(out, ref, atol=1e-4, rtol=1e-4)

    print("KERNEL_OK")
</pallas_src>

<mosaic_0001>
module attributes {stable_mosaic.version = 11 : i64} {
  func.func @_mlp_kernel(%arg0: i32, %arg1: i32, %arg2: i32, %arg3: memref<8x512xf32, #tpu.memory_space<vmem>>, %arg4: memref<128x512xf32, #tpu.memory_space<vmem>>, %arg5: memref<1x128xf32, #tpu.memory_space<vmem>>, %arg6: memref<8x128xf32, #tpu.memory_space<vmem>>, %arg7: memref<8x128xf32, #tpu.memory_space<vmem>>) attributes {dimension_semantics = [#tpu.dimension_semantics<parallel>, #tpu.dimension_semantics<parallel>, #tpu.dimension_semantics<arbitrary>], iteration_bounds = array<i64: 1, 1, 2>, scalar_prefetch = 0 : i64, scratch_operands = 1 : i64, tpu.core_type = #tpu.core_type<tc>, window_params = [{transform_indices = @transform_0, window_bounds = array<i64: 8, 512>}, {transform_indices = @transform_1, window_bounds = array<i64: 128, 512>}, {transform_indices = @transform_2, window_bounds = array<i64: 1, 128>}, {transform_indices = @transform_3, window_bounds = array<i64: 8, 128>}]} {
    %c0_i32 = arith.constant 0 : i32
    %0 = arith.cmpi eq, %arg2, %c0_i32 : i32
    %1 = arith.extui %0 : i1 to i32
    %c0_i32_0 = arith.constant 0 : i32
    %2 = arith.cmpi ne, %1, %c0_i32_0 : i32
    scf.if %2 {
      %cst_9 = arith.constant 0.000000e+00 : f32
      %12 = vector.broadcast %cst_9 : f32 to vector<8x128xf32>
      %c0_10 = arith.constant 0 : index
      %c0_11 = arith.constant 0 : index
      %13 = vector.load %arg7[%c0_10, %c0_11] : memref<8x128xf32, #tpu.memory_space<vmem>>, vector<8x128xf32>
      tpu.vector_store %arg7[%c0_10, %c0_11], %12 {strides = array<i32>} : memref<8x128xf32, #tpu.memory_space<vmem>>, vector<8x128xf32>,
    } else {
    }
    %c0 = arith.constant 0 : index
    %c0_1 = arith.constant 0 : index
    %3 = vector.load %arg7[%c0, %c0_1] : memref<8x128xf32, #tpu.memory_space<vmem>>, vector<8x128xf32>
    %c0_2 = arith.constant 0 : index
    %c0_3 = arith.constant 0 : index
    %4 = vector.load %arg3[%c0_2, %c0_3] : memref<8x512xf32, #tpu.memory_space<vmem>>, vector<8x512xf32>
    %c0_4 = arith.constant 0 : index
    %c0_5 = arith.constant 0 : index
    %5 = vector.load %arg4[%c0_4, %c0_5] : memref<128x512xf32, #tpu.memory_space<vmem>>, vector<128x512xf32>
    %cst = arith.constant dense<0.000000e+00> : vector<8x128xf32>
    %6 = tpu.matmul %4, %5, %cst {dimension_numbers = #tpu.dot_dimension_numbers<[1], [1], [0], [0], [0, 0, 1, 0], [], []>} : vector<8x512xf32>, vector<128x512xf32>, vector<8x128xf32> -> vector<8x128xf32>
    %7 = arith.addf %3, %6 : vector<8x128xf32>
    %c0_6 = arith.constant 0 : index
    %c0_7 = arith.constant 0 : index
    %8 = vector.load %arg7[%c0_6, %c0_7] : memref<8x128xf32, #tpu.memory_space<vmem>>, vector<8x128xf32>
    tpu.vector_store %arg7[%c0_6, %c0_7], %7 {strides = array<i32>} : memref<8x128xf32, #tpu.memory_space<vmem>>, vector<8x128xf32>,
    %c1_i32 = arith.constant 1 : i32
    %9 = arith.cmpi eq, %arg2, %c1_i32 : i32
    %10 = arith.extui %9 : i1 to i32
    %c0_i32_8 = arith.constant 0 : i32
    %11 = arith.cmpi ne, %10, %c0_i32_8 : i32
    scf.if %11 {
      %c0_9 = arith.constant 0 : index
      %c0_10 = arith.constant 0 : index
      %12 = vector.load %arg7[%c0_9, %c0_10] : memref<8x128xf32, #tpu.memory_space<vmem>>, vector<8x128xf32>
      %c0_11 = arith.constant 0 : index
      %c0_12 = arith.constant 0 : index
      %13 = vector.load %arg5[%c0_11, %c0_12] : memref<1x128xf32, #tpu.memory_space<vmem>>, vector<1x128xf32>
      %14 = vector.broadcast %13 : vector<1x128xf32> to vector<8x128xf32>
      %15 = arith.addf %12, %14 : vector<8x128xf32>
      %c0_13 = arith.constant 0 : index
      %c0_14 = arith.constant 0 : index
      %16 = vector.load %arg6[%c0_13, %c0_14] : memref<8x128xf32, #tpu.memory_space<vmem>>, vector<8x128xf32>
      tpu.vector_store %arg6[%c0_13, %c0_14], %15 {strides = array<i32>} : memref<8x128xf32, #tpu.memory_space<vmem>>, vector<8x128xf32>,
    } else {
    }
    return
  }
  func.func @transform_0(%arg0: i32, %arg1: i32, %arg2: i32) -> (i32, i32) {
    %c0_i32 = arith.constant 0 : i32
    return %arg0, %arg2 : i32, i32
  }
  func.func @transform_1(%arg0: i32, %arg1: i32, %arg2: i32) -> (i32, i32) {
    %c0_i32 = arith.constant 0 : i32
    return %arg1, %arg2 : i32, i32
  }
  func.func @transform_2(%arg0: i32, %arg1: i32, %arg2: i32) -> (i32, i32) {
    %c0_i32 = arith.constant 0 : i32
    %c0_i32_0 = arith.constant 0 : i32
    return %c0_i32, %arg1 : i32, i32
  }
  func.func @transform_3(%arg0: i32, %arg1: i32, %arg2: i32) -> (i32, i32) {
    %c0_i32 = arith.constant 0 : i32
    return %arg0, %arg1 : i32, i32
  }
}

</mosaic_0001>

<llo_original>
// kernel: tpu_custom_call.1
$region0: #{tpu_custom_call.1}
  #allocation0 [shape = 'u32[]', space=smem, size = 0x4, offset = 0x4, fixed_abs, tag = 'smem constant byte address 0x4 - core index']
  #allocation1 [shape = 'u32[144,128]{1,0:T(1,128)}', space=vmem, size = 0x12000, scoped, tag = 'internal scratch']
  #allocation2 [shape = 'f32[8,128]{1,0:T(8,128)}', space=vmem, size = 0x1000, scoped, tag = 'scratch operand']
  %s0 = inlined_call_operand.hbm [shape: f32[8,1024], index: 0, kind: input, shape index: {}]
  %s1 = inlined_call_operand.hbm [shape: f32[128,1024], index: 1, kind: input, shape index: {}]
  %s2 = inlined_call_operand.vmem [shape: f32[1,128], index: 2, kind: input, shape index: {}]
  %s3 = inlined_call_operand.hbm [shape: f32[8,128], index: 3, kind: output, shape index: {}]
  %s4 = sld [smem:[#allocation0]]
  $region61: #{tpu_custom_call.1} parent=0
    _
  %s6 = ssub.s32 1, %s4
  %s7 = scalar_select 0, %s6, %s4
  $region1: #{tpu_custom_call.1} parent=0
    #allocation3 [shape = 'u8[32768]{0}', space=vmem, size = 0x8000, scoped, tag = 'input window, operand 0']
    #allocation4 [shape = 's32[2]{0}', space=sflag, size = 0x8, scoped, tag = 'scoped memory for tpu_custom_call.1']
    #allocation5 [shape = 's32[2]{0}', space=sflag, size = 0x8, scoped, tag = 'scoped memory for tpu_custom_call.1']
    #allocation6 [shape = 'u8[524288]{0}', space=vmem, size = 0x80000, scoped, tag = 'input window, operand 1']
    #allocation7 [shape = 's32[2]{0}', space=sflag, size = 0x8, scoped, tag = 'scoped memory for tpu_custom_call.1']
    #allocation8 [shape = 'u8[4096]{0}', space=vmem, size = 0x1000, scoped, tag = 'output window, operand 0, single buffered']
    %8 = vsyncpa [#allocation4], 0
    %s9 = scalar_lea.sflag [#allocation4], 1
    %10 = vsyncpa %s9, 0
    %11 = vsyncpa [#allocation7], 0
    %s12 = scalar_lea.sflag [#allocation7], 1
    %13 = vsyncpa %s12, 0
    %14 = vsyncpa [#allocation5], 0
    loop: start=0, step=1, limit=4
    $region2: #{tpu_custom_call.1} parent=1 // loop_pre_header
      _
    $region3: #{tpu_custom_call.1} parent=1 // loop_header
      %s16 = sphi 0, %s20
      %p17 = scmp.ge.s32.totalorder %s16, 4
      %s23 = sphi 0, %s42
      %s24 = sphi 0, %s38
      %s25 = sphi 0, %s34
      %s26 = sphi 0, %s23
      %s27 = sphi 0, %s24
      %s28 = sphi 0, %s25
      %s29 = sphi 0, %s26
      %s30 = sphi 0, %s27
      %s31 = sphi 0, %s28
      %s47 = sphi 0, %s49
      %s50 = sphi 0, %s47
      %s51 = sphi 0, %s50
      %s67 = sphi 0, %s51
      %s75 = sphi 0, %s77
      %s78 = sphi 0, %s75
      %s79 = sphi 0, %s78
      %s95 = sphi 0, %s79
      %s101 = sphi 0, %s103
      %s104 = sphi 0, %s101
      %s105 = sphi 0, %s104
      %s121 = sphi 0, %s105
      %s129 = sphi 0, %s131
      %s132 = sphi 0, %s129
      %s133 = sphi 0, %s132
      %s149 = sphi 0, %s133
    $region4: #{tpu_custom_call.1} parent=1 // loop_header_branch
      %19 = sbr.rel (%p17) target = $region8
    $region5: #{tpu_custom_call.1} parent=1 // loop_body
      %s21 = ssub.s32 %s16, 1
      %s22 = ssub.s32 %s16, 2
      %s32 = sadd.s32 1, %s25
      %p33 = scmp.ge.s32.totalorder %s32, 2
      %s34 = scalar_select %p33, 0, %s32
      %s35 = sadd.s32 1, %s24
      %s36 = scalar_select %p33, %s35, %s24
      %p37 = scmp.ge.s32.totalorder %s36, 1
      %s38 = scalar_select %p37, 0, %s36
      %s39 = sadd.s32 1, %s23
      %s40 = scalar_select %p37, %s39, %s23
      %p41 = scmp.ge.s32.totalorder %s40, 1
      %s42 = scalar_select %p41, 0, %s40
      %s43 = ssub.s32 %s23, %s42
      %s44 = ssub.s32 %s25, %s34
      %s45 = sor.u32 %s43, %s44
      %p46 = scmp.eq.s32.totalorder %s45, 0
      %s48 = sadd.s32 %s47, 1
      %s49 = scalar_select %p46, %s47, %s48
      %p52 = pneg %p46
      %p53 = scmp.eq.s32.totalorder %s16, 1
      %p54 = por %p52, %p53
      %p55 = scmp.ne.s32.totalorder %s47, %s50
      %p56 = scmp.eq.s32.totalorder %s16, 0
      %p57 = por %p55, %p56
      %p58 = scmp.ne.s32.totalorder %s47, %s50
      %p59 = scmp.eq.s32.totalorder %s21, 1
      %p60 = por %p58, %p59
      %p61 = scmp.ne.s32.totalorder %s50, %s51
      %p62 = scmp.eq.s32.totalorder %s21, 0
      %p63 = por %p61, %p62
      %p64 = scmp.ne.s32.totalorder %s50, %s51
      %p65 = scmp.eq.s32.totalorder %s22, 1
      %p66 = por %p64, %p65
      %p68 = scmp.ne.s32.totalorder %s51, %s67
      %p69 = scmp.eq.s32.totalorder %s22, 0
      %p70 = por %p68, %p69
      %s71 = ssub.s32 %s24, %s38
      %s72 = ssub.s32 %s25, %s34
      %s73 = sor.u32 %s71, %s72
      %p74 = scmp.eq.s32.totalorder %s73, 0
      %s76 = sadd.s32 %s75, 1
      %s77 = scalar_select %p74, %s75, %s76
      %p80 = pneg %p74
      %p81 = scmp.eq.s32.totalorder %s16, 1
      %p82 = por %p80, %p81
      %p83 = scmp.ne.s32.totalorder %s75, %s78
      %p84 = scmp.eq.s32.totalorder %s16, 0
      %p85 = por %p83, %p84
      %p86 = scmp.ne.s32.totalorder %s75, %s78
      %p87 = scmp.eq.s32.totalorder %s21, 1
      %p88 = por %p86, %p87
      %p89 = scmp.ne.s32.totalorder %s78, %s79
      %p90 = scmp.eq.s32.totalorder %s21, 0
      %p91 = por %p89, %p90
      %p92 = scmp.ne.s32.totalorder %s78, %s79
      %p93 = scmp.eq.s32.totalorder %s22, 1
      %p94 = por %p92, %p93
      %p96 = scmp.ne.s32.totalorder %s79, %s95
      %p97 = scmp.eq.s32.totalorder %s22, 0
      %p98 = por %p96, %p97
      %s99 = ssub.s32 %s24, %s38
      %p100 = scmp.eq.s32.totalorder %s99, 0
      %s102 = sadd.s32 %s101, 1
      %s103 = scalar_select %p100, %s101, %s102
      %p106 = pneg %p100
      %p107 = scmp.eq.s32.totalorder %s16, 1
      %p108 = por %p106, %p107
      %p109 = scmp.ne.s32.totalorder %s101, %s104
      %p110 = scmp.eq.s32.totalorder %s16, 0
      %p111 = por %p109, %p110
      %p112 = scmp.ne.s32.totalorder %s101, %s104
      %p113 = scmp.eq.s32.totalorder %s21, 1
      %p114 = por %p112, %p113
      %p115 = scmp.ne.s32.totalorder %s104, %s105
      %p116 = scmp.eq.s32.totalorder %s21, 0
      %p117 = por %p115, %p116
      %p118 = scmp.ne.s32.totalorder %s104, %s105
      %p119 = scmp.eq.s32.totalorder %s22, 1
      %p120 = por %p118, %p119
      %p122 = scmp.ne.s32.totalorder %s105, %s121
      %p123 = scmp.eq.s32.totalorder %s22, 0
      %p124 = por %p122, %p123
      %s125 = ssub.s32 %s23, %s42
      %s126 = ssub.s32 %s24, %s38
      %s127 = sor.u32 %s125, %s126
      %p128 = scmp.eq.s32.totalorder %s127, 0
      %s130 = sadd.s32 %s129, 1
      %s131 = scalar_select %p128, %s129, %s130
      %p134 = pneg %p128
      %p135 = scmp.eq.s32.totalorder %s16, 1
      %p136 = por %p134, %p135
      %p137 = scmp.ne.s32.totalorder %s129, %s132
      %p138 = scmp.eq.s32.totalorder %s16, 0
      %p139 = por %p137, %p138
      %p140 = scmp.ne.s32.totalorder %s129, %s132
      %p141 = scmp.eq.s32.totalorder %s21, 1
      %p142 = por %p140, %p141
      %p143 = scmp.ne.s32.totalorder %s132, %s133
      %p144 = scmp.eq.s32.totalorder %s21, 0
      %p145 = por %p143, %p144
      %p146 = scmp.ne.s32.totalorder %s132, %s133
      %p147 = scmp.eq.s32.totalorder %s22, 1
      %p148 = por %p146, %p147
      %p150 = scmp.ne.s32.totalorder %s133, %s149
      %p151 = scmp.eq.s32.totalorder %s22, 0
      %p152 = por %p150, %p151
      %p153 = scmp.le.s32.totalorder 1, %s16
      %p154 = scmp.lt.s32.totalorder %s16, 3
      %p155 = pnand %p153, %p154
      %p156 = pneg %p155
      // Predicated region
      $region9: #{tpu_custom_call.1} parent=5 // pred_check
        _
      $region10: #{tpu_custom_call.1} parent=5 // pred_check_branch
        %158 = sbr.rel (%p155) target = $region12
      $region11: #{tpu_custom_call.1} parent=5 // pred_region
        %s159 = ssub.s32 %s16, 1
        // Predicated region
        $region13: #{tpu_custom_call.1} parent=11 // pred_check
          %p160 = pneg %p117
        $region14: #{tpu_custom_call.1} parent=11 // pred_check_branch
          %162 = sbr.rel (%p160) target = $region16
        $region15: #{tpu_custom_call.1} parent=11 // pred_region
          %p163 = scmp.lt.s32.totalorder %s27, 0
          %s164 = scalar_select %p163, %s27, 0
          %s165 = scalar_lea.vmem %s2, %s164
        $region16: #{tpu_custom_call.1} parent=11 // pred_fallthru
          _
      $region12: #{tpu_custom_call.1} parent=5 // pred_fallthru
        _
      %p166 = scmp.lt.s32.totalorder %s16, 2
      // Predicated region
      $region17: #{tpu_custom_call.1} parent=5 // pred_check
        %p167 = pneg %p166
      $region18: #{tpu_custom_call.1} parent=5 // pred_check_branch
        %169 = sbr.rel (%p167) target = $region20
      $region19: #{tpu_custom_call.1} parent=5 // pred_region
        // Predicated region
        $region21: #{tpu_custom_call.1} parent=19 // pred_check
          %p170 = pneg %p57
        $region22: #{tpu_custom_call.1} parent=19 // pred_check_branch
          %172 = sbr.rel (%p170) target = $region24
        $region23: #{tpu_custom_call.1} parent=19 // pred_region
          %s173 = sand.u32 %s47, 1
          %s174 = scalar_lea.sflag [#allocation4], %s173
          %s175 = sand.u32 %s47, 1
          %s176 = smul.addr %s175, 32
          %s177 = scalar_lea.vmem [#allocation3], %s176
          %s178 = smul.u32 4, %s25
          %s180 = ssub.s32 512, 512
          %181 = vsyncadd %s174, %s180
          %s182 = smul.addr %s23, 8
          %s183 = sadd.s32 %s178, %s182
          %s184 = smul.addr %s183, 128
          %s185 = scalar_lea.hbm %s0, %s184
          %s187 = sshll.u32 %s177, 4
          %s188 = int_to_ptr.vmem [resolvable:$true] %s187
          %190 = dma.hbm_to_vmem [thread:$0]  %s185, 512, %s188, %s174
        $region24: #{tpu_custom_call.1} parent=19 // pred_fallthru
          _
        // Predicated region
        $region25: #{tpu_custom_call.1} parent=19 // pred_check
          %p191 = pneg %p85
        $region26: #{tpu_custom_call.1} parent=19 // pred_check_branch
          %193 = sbr.rel (%p191) target = $region28
        $region27: #{tpu_custom_call.1} parent=19 // pred_region
          %s194 = sand.u32 %s75, 1
          %s195 = scalar_lea.sflag [#allocation7], %s194
          %s196 = sand.u32 %s75, 1
          %s197 = smul.addr %s196, 512
          %s198 = scalar_lea.vmem [#allocation6], %s197
          %s199 = smul.u32 16, %s24
          %s200 = smul.u32 4, %s25
          %s202 = ssub.s32 8192, 8192
          %203 = vsyncadd %s195, %s202
          %s204 = smul.addr %s199, 8
          %s205 = sadd.s32 %s200, %s204
          %s206 = smul.addr %s205, 128
          %s207 = scalar_lea.hbm %s1, %s206
          %s208 = sshll.u32 %s198, 4
          %s209 = int_to_ptr.vmem [resolvable:$true] %s208
          %214 = dma.hbm_to_vmem [thread:$0]  %s207, 8192, %s209, %s195, 1024, 512, 32
        $region28: #{tpu_custom_call.1} parent=19 // pred_fallthru
          _
      $region20: #{tpu_custom_call.1} parent=5 // pred_fallthru
        _
      %p215 = scmp.le.s32.totalorder 1, %s16
      %p216 = scmp.lt.s32.totalorder %s16, 3
      %p217 = pnand %p215, %p216
      %p218 = pneg %p217
      // Predicated region
      $region29: #{tpu_custom_call.1} parent=5 // pred_check
        _
      $region30: #{tpu_custom_call.1} parent=5 // pred_check_branch
        %220 = sbr.rel (%p217) target = $region32
      $region31: #{tpu_custom_call.1} parent=5 // pred_region
        %s221 = ssub.s32 %s16, 1
        %s222 = sand.u32 %s50, 1
        %s223 = scalar_lea.sflag [#allocation4], %s222
        %s224 = sand.u32 %s50, 1
        %s225 = smul.addr %s224, 32
        %s226 = scalar_lea.vmem [#allocation3], %s225
        // Predicated region
        $region33: #{tpu_custom_call.1} parent=31 // pred_check
          %p227 = pneg %p63
        $region34: #{tpu_custom_call.1} parent=31 // pred_check_branch
          %229 = sbr.rel (%p227) target = $region36
        $region35: #{tpu_custom_call.1} parent=31 // pred_region
          %230 = dma.done %s223, 512
        $region36: #{tpu_custom_call.1} parent=31 // pred_fallthru
          _
        %s231 = sand.u32 %s78, 1
        %s232 = scalar_lea.sflag [#allocation7], %s231
        %s233 = sand.u32 %s78, 1
        %s234 = smul.addr %s233, 512
        %s235 = scalar_lea.vmem [#allocation6], %s234
        // Predicated region
        $region37: #{tpu_custom_call.1} parent=31 // pred_check
          %p236 = pneg %p91
        $region38: #{tpu_custom_call.1} parent=31 // pred_check_branch
          %238 = sbr.rel (%p236) target = $region40
        $region39: #{tpu_custom_call.1} parent=31 // pred_region
          %239 = dma.done %s232, 8192
        $region40: #{tpu_custom_call.1} parent=31 // pred_fallthru
          _
        %s240 = sand.u32 %s50, 1
        %s241 = scalar_lea.sflag [#allocation4], %s240
        %s242 = sand.u32 %s50, 1
        %s243 = smul.addr %s242, 32
        %s244 = scalar_lea.vmem [#allocation3], %s243
        %p245 = pneg %p63
        %p246 = pneg %p60
        %s247 = sand.u32 %s78, 1
        %s248 = scalar_lea.sflag [#allocation7], %s247
        %s249 = sand.u32 %s78, 1
        %s250 = smul.addr %s249, 512
        %s251 = scalar_lea.vmem [#allocation6], %s250
        %p252 = pneg %p91
        %p253 = pneg %p88
        %p254 = scmp.lt.s32.totalorder %s27, 0
        %s255 = scalar_select %p254, %s27, 0
        %s256 = scalar_lea.vmem %s2, %s255
        %p257 = pneg %p117
        %p258 = pneg %p114
        %p259 = pneg %p145
        %p260 = pneg %p142
        %s261 = smul.u32 4, %s28
        %s262 = smul.u32 16, %s27
        %s263 = smul.u32 4, %s28
        %p264 = scmp.lt.s32.totalorder %s27, 0
        %s265 = scalar_select %p264, %s27, 0
        %s266 = scalar_lea.vmem %s2, %s265
        %p267 = scmp.eq.s32.totalorder %s28, 0
        // Predicated region
        $region41: #{tpu_custom_call.1} parent=31 // pred_check
          %p268 = pneg %p267
        $region42: #{tpu_custom_call.1} parent=31 // pred_check_branch
          %270 = sbr.rel (%p268) target = $region44
        $region43: #{tpu_custom_call.1} parent=31 // pred_region
          %271 = vst [vmem:[#allocation2] sm:$0xff] 0.0
        $region44: #{tpu_custom_call.1} parent=31 // pred_fallthru
          _
        %v272 = vld [vmem:[#allocation2] sm:$0xff]
        %v273 = vld [vmem:[%s226] sm:$0xff]
        %v274 = vld [vmem:[%s226 + $0x8] sm:$0xff]
        %v275 = vld [vmem:[%s226 + $0x10] sm:$0xff]
        %v276 = vld [vmem:[%s226 + $0x18] sm:$0xff]
        %v277 = vld [vmem:[%s235] sm:$0xff]
        %v278 = vld [vmem:[%s235 + $0x8] sm:$0xff]
        %v279 = vld [vmem:[%s235 + $0x10] sm:$0xff]
        %v280 = vld [vmem:[%s235 + $0x18] sm:$0xff]
        %v281 = vld [vmem:[%s235 + $0x20] sm:$0xff]
        %v282 = vld [vmem:[%s235 + $0x28] sm:$0xff]
        %v283 = vld [vmem:[%s235 + $0x30] sm:$0xff]
        %v284 = vld [vmem:[%s235 + $0x38] sm:$0xff]
        %v285 = vld [vmem:[%s235 + $0x40] sm:$0xff]
        %v286 = vld [vmem:[%s235 + $0x48] sm:$0xff]
        %v287 = vld [vmem:[%s235 + $0x50] sm:$0xff]
        %v288 = vld [vmem:[%s235 + $0x58] sm:$0xff]
        %v289 = vld [vmem:[%s235 + $0x60] sm:$0xff]
        %v290 = vld [vmem:[%s235 + $0x68] sm:$0xff]
        %v291 = vld [vmem:[%s235 + $0x70] sm:$0xff]
        %v292 = vld [vmem:[%s235 + $0x78] sm:$0xff]
        %v293 = vld [vmem:[%s235 + $0x80] sm:$0xff]
        %v294 = vld [vmem:[%s235 + $0x88] sm:$0xff]
        %v295 = vld [vmem:[%s235 + $0x90] sm:$0xff]
        %v296 = vld [vmem:[%s235 + $0x98] sm:$0xff]
        %v297 = vld [vmem:[%s235 + $0xa0] sm:$0xff]
        %v298 = vld [vmem:[%s235 + $0xa8] sm:$0xff]
        %v299 = vld [vmem:[%s235 + $0xb0] sm:$0xff]
        %v300 = vld [vmem:[%s235 + $0xb8] sm:$0xff]
        %v301 = vld [vmem:[%s235 + $0xc0] sm:$0xff]
        %v302 = vld [vmem:[%s235 + $0xc8] sm:$0xff]
        %v303 = vld [vmem:[%s235 + $0xd0] sm:$0xff]
        %v304 = vld [vmem:[%s235 + $0xd8] sm:$0xff]
        %v305 = vld [vmem:[%s235 + $0xe0] sm:$0xff]
        %v306 = vld [vmem:[%s235 + $0xe8] sm:$0xff]
        %v307 = vld [vmem:[%s235 + $0xf0] sm:$0xff]
        %v308 = vld [vmem:[%s235 + $0xf8] sm:$0xff]
        %v309 = vld [vmem:[%s235 + $0x100] sm:$0xff]
        %v310 = vld [vmem:[%s235 + $0x108] sm:$0xff]
        %v311 = vld [vmem:[%s235 + $0x110] sm:$0xff]
        %v312 = vld [vmem:[%s235 + $0x118] sm:$0xff]
        %v313 = vld [vmem:[%s235 + $0x120] sm:$0xff]
        %v314 = vld [vmem:[%s235 + $0x128] sm:$0xff]
        %v315 = vld [vmem:[%s235 + $0x130] sm:$0xff]
        %v316 = vld [vmem:[%s235 + $0x138] sm:$0xff]
        %v317 = vld [vmem:[%s235 + $0x140] sm:$0xff]
        %v318 = vld [vmem:[%s235 + $0x148] sm:$0xff]
        %v319 = vld [vmem:[%s235 + $0x150] sm:$0xff]
        %v320 = vld [vmem:[%s235 + $0x158] sm:$0xff]
        %v321 = vld [vmem:[%s235 + $0x160] sm:$0xff]
        %v322 = vld [vmem:[%s235 + $0x168] sm:$0xff]
        %v323 = vld [vmem:[%s235 + $0x170] sm:$0xff]
        %v324 = vld [vmem:[%s235 + $0x178] sm:$0xff]
        %v325 = vld [vmem:[%s235 + $0x180] sm:$0xff]
        %v326 = vld [vmem:[%s235 + $0x188] sm:$0xff]
        %v327 = vld [vmem:[%s235 + $0x190] sm:$0xff]
        %v328 = vld [vmem:[%s235 + $0x198] sm:$0xff]
        %v329 = vld [vmem:[%s235 + $0x1a0] sm:$0xff]
        %v330 = vld [vmem:[%s235 + $0x1a8] sm:$0xff]
        %v331 = vld [vmem:[%s235 + $0x1b0] sm:$0xff]
        %v332 = vld [vmem:[%s235 + $0x1b8] sm:$0xff]
        %v333 = vld [vmem:[%s235 + $0x1c0] sm:$0xff]
        %v334 = vld [vmem:[%s235 + $0x1c8] sm:$0xff]
        %v335 = vld [vmem:[%s235 + $0x1d0] sm:$0xff]
        %v336 = vld [vmem:[%s235 + $0x1d8] sm:$0xff]
        %v337 = vld [vmem:[%s235 + $0x1e0] sm:$0xff]
        %v338 = vld [vmem:[%s235 + $0x1e8] sm:$0xff]
        %v339 = vld [vmem:[%s235 + $0x1f0] sm:$0xff]
        %v340 = vld [vmem:[%s235 + $0x1f8] sm:$0xff]
        %341 = vmatprep.subr.mxu0 %v278
        %342 = vmatpush1.xpose.msra.mxu0 %v277
        %343 = vmatprep.subr.mxu0 %v282
        %344 = vmatpush1.xpose.msra.mxu0 %v281
        %345 = vmatprep.subr.mxu0 %v286
        %346 = vmatpush1.xpose.msra.mxu0 %v285
        %347 = vmatprep.subr.mxu0 %v290
        %348 = vmatpush1.xpose.msra.mxu0 %v289
        %349 = vmatprep.subr.mxu0 %v294
        %350 = vmatpush1.xpose.msra.mxu0 %v293
        %351 = vmatprep.subr.mxu0 %v298
        %352 = vmatpush1.xpose.msra.mxu0 %v297
        %353 = vmatprep.subr.mxu0 %v302
        %354 = vmatpush1.xpose.msra.mxu0 %v301
        %355 = vmatprep.subr.mxu0 %v306
        %356 = vmatpush1.xpose.msra.mxu0 %v305
        %357 = vmatprep.subr.mxu0 %v310
        %358 = vmatpush1.xpose.msra.mxu0 %v309
        %359 = vmatprep.subr.mxu0 %v314
        %360 = vmatpush1.xpose.msra.mxu0 %v313
        %361 = vmatprep.subr.mxu0 %v318
        %362 = vmatpush1.xpose.msra.mxu0 %v317
        %363 = vmatprep.subr.mxu0 %v322
        %364 = vmatpush1.xpose.msra.mxu0 %v321
        %365 = vmatprep.subr.mxu0 %v326
        %366 = vmatpush1.xpose.msra.mxu0 %v325
        %367 = vmatprep.subr.mxu0 %v330
        %368 = vmatpush1.xpose.msra.mxu0 %v329
        %369 = vmatprep.subr.mxu0 %v334
        %370 = vmatpush1.xpose.msra.mxu0 %v333
        %371 = vmatprep.subr.mxu0 %v338
        %372 = vmatpush1.xpose.msra.mxu0 %v337
        %373 = vmatprep.subr.mxu0 0.0
        %374 = vmatpush1.xpose.msra.mxu0 0.0
        %375 = vmatprep.subr.mxu0 0.0
        %376 = vmatpush1.xpose.msra.mxu0 0.0
        %377 = vmatprep.subr.mxu0 0.0
        %378 = vmatpush1.xpose.msra.mxu0 0.0
        %379 = vmatprep.subr.mxu0 0.0
        %380 = vmatpush1.xpose.msra.mxu0 0.0
        %381 = vmatprep.subr.mxu0 0.0
        %382 = vmatpush1.xpose.msra.mxu0 0.0
        %383 = vmatprep.subr.mxu0 0.0
        %384 = vmatpush1.xpose.msra.mxu0 0.0
        %385 = vmatprep.subr.mxu0 0.0
        %386 = vmatpush1.xpose.msra.mxu0 0.0
        %387 = vmatprep.subr.mxu0 0.0
        %388 = vmatpush1.xpose.msra.mxu0 0.0
        %389 = vmatprep.subr.mxu0 0.0
        %390 = vmatpush1.xpose.msra.mxu0 0.0
        %391 = vmatprep.subr.mxu0 0.0
        %392 = vmatpush1.xpose.msra.mxu0 0.0
        %393 = vmatprep.subr.mxu0 0.0
        %394 = vmatpush1.xpose.msra.mxu0 0.0
        %395 = vmatprep.subr.mxu0 0.0
        %396 = vmatpush1.xpose.msra.mxu0 0.0
        %397 = vmatprep.subr.mxu0 0.0
        %398 = vmatpush1.xpose.msra.mxu0 0.0
        %399 = vmatprep.subr.mxu0 0.0
        %400 = vmatpush1.xpose.msra.mxu0 0.0
        %401 = vmatprep.subr.mxu0 0.0
        %402 = vmatpush1.xpose.msra.mxu0 0.0
        %403 = vmatprep.subr.mxu0 0.0
        %404 = vmatpush1.xpose.msra.mxu0 0.0
        %405 = vmatprep.mubr.f32.mxu0 %v274
        %406 = vmatmul.mubr.f32.gmra.mrb[0].mxu0 %v273
        %v407 = vpop.f32.mrb[0].mxu0
        %v408 = vadd.f32 0.0, %v407
        %v409 = vpop.f32.mrb[0].mxu0
        %410 = vdwg.mxu0
        %411 = vmatprep.subr.mxu0 %v280
        %412 = vmatpush1.xpose.msra.mxu0 %v279
        %413 = vmatprep.subr.mxu0 %v284
        %414 = vmatpush1.xpose.msra.mxu0 %v283
        %415 = vmatprep.subr.mxu0 %v288
        %416 = vmatpush1.xpose.msra.mxu0 %v287
        %417 = vmatprep.subr.mxu0 %v292
        %418 = vmatpush1.xpose.msra.mxu0 %v291
        %419 = vmatprep.subr.mxu0 %v296
        %420 = vmatpush1.xpose.msra.mxu0 %v295
        %421 = vmatprep.subr.mxu0 %v300
        %422 = vmatpush1.xpose.msra.mxu0 %v299
        %423 = vmatprep.subr.mxu0 %v304
        %424 = vmatpush1.xpose.msra.mxu0 %v303
        %425 = vmatprep.subr.mxu0 %v308
        %426 = vmatpush1.xpose.msra.mxu0 %v307
        %427 = vmatprep.subr.mxu0 %v312
        %428 = vmatpush1.xpose.msra.mxu0 %v311
        %429 = vmatprep.subr.mxu0 %v316
        %430 = vmatpush1.xpose.msra.mxu0 %v315
        %431 = vmatprep.subr.mxu0 %v320
        %432 = vmatpush1.xpose.msra.mxu0 %v319
        %433 = vmatprep.subr.mxu0 %v324
        %434 = vmatpush1.xpose.msra.mxu0 %v323
        %435 = vmatprep.subr.mxu0 %v328
        %436 = vmatpush1.xpose.msra.mxu0 %v327
        %437 = vmatprep.subr.mxu0 %v332
        %438 = vmatpush1.xpose.msra.mxu0 %v331
        %439 = vmatprep.subr.mxu0 %v336
        %440 = vmatpush1.xpose.msra.mxu0 %v335
        %441 = vmatprep.subr.mxu0 %v340
        %442 = vmatpush1.xpose.msra.mxu0 %v339
        %443 = vmatprep.subr.mxu0 0.0
        %444 = vmatpush1.xpose.msra.mxu0 0.0
        %445 = vmatprep.subr.mxu0 0.0
        %446 = vmatpush1.xpose.msra.mxu0 0.0
        %447 = vmatprep.subr.mxu0 0.0
        %448 = vmatpush1.xpose.msra.mxu0 0.0
        %449 = vmatprep.subr.mxu0 0.0
        %450 = vmatpush1.xpose.msra.mxu0 0.0
        %451 = vmatprep.subr.mxu0 0.0
        %452 = vmatpush1.xpose.msra.mxu0 0.0
        %453 = vmatprep.subr.mxu0 0.0
        %454 = vmatpush1.xpose.msra.mxu0 0.0
        %455 = vmatprep.subr.mxu0 0.0
        %456 = vmatpush1.xpose.msra.mxu0 0.0
        %457 = vmatprep.subr.mxu0 0.0
        %458 = vmatpush1.xpose.msra.mxu0 0.0
        %459 = vmatprep.subr.mxu0 0.0
        %460 = vmatpush1.xpose.msra.mxu0 0.0
        %461 = vmatprep.subr.mxu0 0.0
        %462 = vmatpush1.xpose.msra.mxu0 0.0
        %463 = vmatprep.subr.mxu0 0.0
        %464 = vmatpush1.xpose.msra.mxu0 0.0
        %465 = vmatprep.subr.mxu0 0.0
        %466 = vmatpush1.xpose.msra.mxu0 0.0
        %467 = vmatprep.subr.mxu0 0.0
        %468 = vmatpush1.xpose.msra.mxu0 0.0
        %469 = vmatprep.subr.mxu0 0.0
        %470 = vmatpush1.xpose.msra.mxu0 0.0
        %471 = vmatprep.subr.mxu0 0.0
        %472 = vmatpush1.xpose.msra.mxu0 0.0
        %473 = vmatprep.subr.mxu0 0.0
        %474 = vmatpush1.xpose.msra.mxu0 0.0
        %475 = vmatprep.mubr.f32.mxu0 %v276
        %476 = vmatmul.mubr.f32.gmra.mrb[0].mxu0 %v275
        %v477 = vpop.f32.mrb[0].mxu0
        %v478 = vadd.f32 %v408, %v477
        %v479 = vpop.f32.mrb[0].mxu0
        %480 = vdwg.mxu0
        %v481 = vadd.f32 %v272, %v478
        %482 = vst [vmem:[#allocation2] sm:$0xff] %v481
        %p483 = scmp.eq.s32.totalorder %s28, 1
        // Predicated region
        $region45: #{tpu_custom_call.1} parent=31 // pred_check
          %p484 = pneg %p483
        $region46: #{tpu_custom_call.1} parent=31 // pred_check_branch
          %486 = sbr.rel (%p484) target = $region48
        $region47: #{tpu_custom_call.1} parent=31 // pred_region
          %v487 = vld [vmem:[#allocation2] sm:$0xff]
          %v488 = vld [vmem:[%s266] sm:$0x1]
          %v490 = vlaneseq
          %v491 = vshrl.u32 %v490, 7
          %v492 = vsub.s32 0, %v491
          %v493 = vrot.slane %v488, %v492
          %v495 = vadd.f32 %v487, %v493
          %496 = vst [vmem:[#allocation8] sm:$0xff] %v495
        $region48: #{tpu_custom_call.1} parent=31 // pred_fallthru
          _
        // Predicated region
        $region49: #{tpu_custom_call.1} parent=31 // pred_check
          %p497 = pneg %p142
        $region50: #{tpu_custom_call.1} parent=31 // pred_check_branch
          %499 = sbr.rel (%p497) target = $region52
        $region51: #{tpu_custom_call.1} parent=31 // pred_region
          %s501 = ssub.s32 128, 128
          %502 = vsyncadd [#allocation5], %s501
          %s503 = sadd.s32 %s27, %s26
          %s504 = smul.addr %s503, 128
          %s505 = scalar_lea.hbm %s3, %s504
          %s507 = sshll.u32 [#allocation8], 4
          %s508 = int_to_ptr.vmem [resolvable:$true] %s507
          %510 = dma.vmem_to_hbm [thread:$0]  %s508, 128, %s505, [#allocation5]
        $region52: #{tpu_custom_call.1} parent=31 // pred_fallthru
          _
        // Predicated region
        $region53: #{tpu_custom_call.1} parent=31 // pred_check
          %p511 = pneg %p142
        $region54: #{tpu_custom_call.1} parent=31 // pred_check_branch
          %513 = sbr.rel (%p511) target = $region56
        $region55: #{tpu_custom_call.1} parent=31 // pred_region
          %514 = dma.done [#allocation5], 128
        $region56: #{tpu_custom_call.1} parent=31 // pred_fallthru
          _
      $region32: #{tpu_custom_call.1} parent=5 // pred_fallthru
        _
      %p515 = scmp.le.s32.totalorder 2, %s16
      // Predicated region
      $region57: #{tpu_custom_call.1} parent=5 // pred_check
        %p516 = pneg %p515
      $region58: #{tpu_custom_call.1} parent=5 // pred_check_branch
        %518 = sbr.rel (%p516) target = $region60
      $region59: #{tpu_custom_call.1} parent=5 // pred_region
        %s519 = ssub.s32 %s16, 2
      $region60: #{tpu_custom_call.1} parent=5 // pred_fallthru
        _
    $region6: #{tpu_custom_call.1} parent=1 // loop_footer
      %s20 = sadd.s32 1, %s16
    $region7: #{tpu_custom_call.1} parent=1 // loop_footer_branch
      %15 = sbr.rel target = $region3
    $region8: #{tpu_custom_call.1} parent=1 // loop_exit
      _
    %520 = vsyncpa [#allocation4], 1
    %s521 = scalar_lea.sflag [#allocation4], 1
    %522 = vsyncpa %s521, 1
    %523 = vsyncpa [#allocation7], 1
    %s524 = scalar_lea.sflag [#allocation7], 1
    %525 = vsyncpa %s524, 1
    %526 = vsyncpa [#allocation5], 1
    %s527 = scalar_lea.sflag [#allocation5], 1
    %528 = vsyncpa %s527, 1

</llo_original>
